<compile_context>
chip_gen: v7x
topology: tpu7x:2x2x1
jax: 0.10.0
libtpu: 0.0.40
codegen_flags: <defaults>
</compile_context>

<pallas_src>
import jax
import jax.numpy as jnp
from jax import lax
from jax.experimental import pallas as pl
from jax.experimental.pallas import tpu as pltpu

LN_EPS = 1e-5
LANE = 128


def _make_kernel(C, eps):
    inv_c = 1.0 / C

    def kernel(xp_ref, scale_ref, bias_ref, out_ref):
        # xp_ref:    (4, C, Mt)  parity-split input tile (f32), lanes = spatial
        # scale_ref: (C, 4)      gamma[c] * conv_w[c, p]
        # bias_ref:  (C, 1)      beta[c]  * sum_p conv_w[c, p]
        # out_ref:   (C, Mt)
        Mt = out_ref.shape[1]
        acc = jnp.zeros((C, Mt), jnp.float32)
        for p in range(4):                               # static unroll: 2x2 taps
            xp = xp_ref[p].astype(jnp.float32)           # (C, Mt)
            s1 = jnp.sum(xp, axis=0, keepdims=True)      # (1, Mt) single pass
            s2 = jnp.sum(xp * xp, axis=0, keepdims=True)
            mean = s1 * inv_c
            var = s2 * inv_c - mean * mean
            inv_std = lax.rsqrt(var + eps)               # EUP, off the VALU path
            w_col = scale_ref[:, p:p + 1]                # (C, 1) fused gamma*tap
            acc = acc + (xp - mean) * (inv_std * w_col)
        out_ref[...] = (acc + bias_ref[...]).astype(out_ref.dtype)

    return kernel


def lnorm_reduce_forward(x_nchw, gamma, beta, conv_w, *, eps=LN_EPS):
    """x: (N, C, H, W); gamma/beta: (C,) LayerNorm affine;
       conv_w: (C, 1, 2, 2) depthwise conv kernel (PyTorch layout)."""
    N, C, H, W = x_nchw.shape
    Ho, Wo = (H - 2) // 2 + 1, (W - 2) // 2 + 1
    M = N * Ho * Wo

    # De-interleave the 2x2 / stride-2 taps (wrapper-side layout plumbing):
    #   xp[a*2+b, c, n*Ho*Wo + i*Wo + j] = x[n, c, 2i+a, 2j+b]
    xc = x_nchw[:, :, :2 * Ho, :2 * Wo]
    xr = xc.reshape(N, C, Ho, 2, Wo, 2)
    xp = jnp.transpose(xr, (3, 5, 1, 0, 2, 4)).reshape(4, C, M).astype(jnp.float32)

    # Fold LayerNorm affine into the per-channel depthwise taps.
    w_pc = jnp.transpose(conv_w[:, 0].reshape(C, 4))        # (4, C), p = a*2+b
    scale_k = jnp.transpose(gamma[None, :] * w_pc)          # (C, 4)
    bias_k = (beta * jnp.sum(w_pc, axis=0)).reshape(C, 1)   # (C, 1)

    # Tile the lane-dense spatial axis (multiple of 128, up to 1024 per step).
    m_up = ((M + LANE - 1) // LANE) * LANE
    Mt = min(m_up, 8 * LANE)
    Mpad = ((M + Mt - 1) // Mt) * Mt
    if Mpad != M:
        xp = jnp.pad(xp, ((0, 0), (0, 0), (0, Mpad - M)))

    out = pl.pallas_call(
        _make_kernel(C, eps),
        out_shape=jax.ShapeDtypeStruct((C, Mpad), jnp.float32),
        grid=(Mpad // Mt,),
        in_specs=[
            pl.BlockSpec((4, C, Mt), lambda i: (0, 0, i)),
            pl.BlockSpec((C, 4), lambda i: (0, 0)),
            pl.BlockSpec((C, 1), lambda i: (0, 0)),
        ],
        out_specs=pl.BlockSpec((C, Mt), lambda i: (0, i)),
        compiler_params=pltpu.CompilerParams(
            dimension_semantics=("parallel",)),
    )(xp, scale_k, bias_k)

    out = out[:, :M].reshape(C, N, Ho, Wo)
    return jnp.transpose(out, (1, 0, 2, 3))                 # back to NCHW


def ref_forward(x, gamma, beta, conv_w, *, eps=LN_EPS):
    """Pure-JAX reference matching the PyTorch module."""
    u = jnp.mean(x, axis=1, keepdims=True)
    s = jnp.mean(jnp.square(x - u), axis=1, keepdims=True)
    xn = (x - u) / jnp.sqrt(s + eps)
    xn = gamma.reshape(1, -1, 1, 1) * xn + beta.reshape(1, -1, 1, 1)
    C = x.shape[1]
    return lax.conv_general_dilated(
        xn, conv_w, (2, 2), [(0, 0), (0, 0)],
        dimension_numbers=("NCHW", "OIHW", "NCHW"),
        feature_group_count=C)


if __name__ == "__main__":
    N, C, H, W = 2, 4, 16, 16

    key = jax.random.PRNGKey(0)
    kx, kw, kg, kb = jax.random.split(key, 4)
    x = jax.random.normal(kx, (N, C, H, W), jnp.float32)
    conv_w = 0.5 * jax.random.normal(kw, (C, 1, 2, 2), jnp.float32)
    # LayerNorm affine (module defaults are ones/zeros; perturbed here to
    # exercise the affine-folding path).
    gamma = 1.0 + 0.1 * jax.random.normal(kg, (C,), jnp.float32)
    beta = 0.1 * jax.random.normal(kb, (C,), jnp.float32)

    out = lnorm_reduce_forward(x, gamma, beta, conv_w)
    out = jax.block_until_ready(out)

    ref = ref_forward(x, gamma, beta, conv_w)
    assert out.shape == (N, C, H // 2, W // 2), out.shape
    max_err = float(jnp.max(jnp.abs(out - ref)))
    assert jnp.allclose(out, ref, rtol=1e-3, atol=1e-3), max_err
    print("KERNEL_OK")
</pallas_src>

<mosaic_0001>
module attributes {stable_mosaic.version = 11 : i64} {
  func.func @kernel(%arg0: i32, %arg1: memref<4x4x128xf32, #tpu.memory_space<vmem>>, %arg2: memref<4x4xf32, #tpu.memory_space<vmem>>, %arg3: memref<4x1xf32, #tpu.memory_space<vmem>>, %arg4: memref<4x128xf32, #tpu.memory_space<vmem>>) attributes {dimension_semantics = [#tpu.dimension_semantics<parallel>], iteration_bounds = array<i64: 1>, scalar_prefetch = 0 : i64, scratch_operands = 0 : i64, tpu.core_type = #tpu.core_type<tc>, window_params = [{transform_indices = @transform_0, window_bounds = array<i64: 4, 4, 128>}, {pipeline_mode = #tpu.pipeline_mode<synchronous>, transform_indices = @transform_1, window_bounds = array<i64: 4, 4>}, {pipeline_mode = #tpu.pipeline_mode<synchronous>, transform_indices = @transform_2, window_bounds = array<i64: 4, 1>}, {transform_indices = @transform_3, window_bounds = array<i64: 4, 128>}]} {
    %cst = arith.constant 0.000000e+00 : f32
    %0 = vector.broadcast %cst : f32 to vector<4x128xf32>
    %c0 = arith.constant 0 : index
    %c0_0 = arith.constant 0 : index
    %c0_1 = arith.constant 0 : index
    %1 = vector.load %arg1[%c0, %c0_0, %c0_1] : memref<4x4x128xf32, #tpu.memory_space<vmem>>, vector<1x4x128xf32>
    %2 = vector.shape_cast %1 : vector<1x4x128xf32> to vector<4x128xf32>
    %cst_2 = arith.constant dense<0.000000e+00> : vector<128xf32>
    %3 = vector.multi_reduction <add>, %2, %cst_2 [0] : vector<4x128xf32> to vector<128xf32>
    %4 = vector.shape_cast %3 : vector<128xf32> to vector<1x128xf32>
    %5 = arith.mulf %2, %2 : vector<4x128xf32>
    %cst_3 = arith.constant dense<0.000000e+00> : vector<128xf32>
    %6 = vector.multi_reduction <add>, %5, %cst_3 [0] : vector<4x128xf32> to vector<128xf32>
    %7 = vector.shape_cast %6 : vector<128xf32> to vector<1x128xf32>
    %cst_4 = arith.constant 2.500000e-01 : f32
    %8 = vector.broadcast %cst_4 : f32 to vector<1x128xf32>
    %9 = arith.mulf %4, %8 : vector<1x128xf32>
    %cst_5 = arith.constant 2.500000e-01 : f32
    %10 = vector.broadcast %cst_5 : f32 to vector<1x128xf32>
    %11 = arith.mulf %7, %10 : vector<1x128xf32>
    %12 = arith.mulf %9, %9 : vector<1x128xf32>
    %13 = arith.subf %11, %12 : vector<1x128xf32>
    %cst_6 = arith.constant 9.99999974E-6 : f32
    %14 = vector.broadcast %cst_6 : f32 to vector<1x128xf32>
    %15 = arith.addf %13, %14 : vector<1x128xf32>
    %16 = math.rsqrt %15 : vector<1x128xf32>
    %c0_7 = arith.constant 0 : index
    %c0_8 = arith.constant 0 : index
    %17 = vector.load %arg2[%c0_7, %c0_8] : memref<4x4xf32, #tpu.memory_space<vmem>>, vector<4x1xf32>
    %18 = vector.broadcast %9 : vector<1x128xf32> to vector<4x128xf32>
    %19 = arith.subf %2, %18 : vector<4x128xf32>
    %20 = vector.broadcast %16 : vector<1x128xf32> to vector<4x128xf32>
    %21 = vector.broadcast %17 : vector<4x1xf32> to vector<4x128xf32>
    %22 = arith.mulf %20, %21 : vector<4x128xf32>
    %23 = arith.mulf %19, %22 : vector<4x128xf32>
    %24 = arith.addf %0, %23 : vector<4x128xf32>
    %c1 = arith.constant 1 : index
    %c0_9 = arith.constant 0 : index
    %c0_10 = arith.constant 0 : index
    %25 = vector.load %arg1[%c1, %c0_9, %c0_10] : memref<4x4x128xf32, #tpu.memory_space<vmem>>, vector<1x4x128xf32>
    %26 = vector.shape_cast %25 : vector<1x4x128xf32> to vector<4x128xf32>
    %cst_11 = arith.constant dense<0.000000e+00> : vector<128xf32>
    %27 = vector.multi_reduction <add>, %26, %cst_11 [0] : vector<4x128xf32> to vector<128xf32>
    %28 = vector.shape_cast %27 : vector<128xf32> to vector<1x128xf32>
    %29 = arith.mulf %26, %26 : vector<4x128xf32>
    %cst_12 = arith.constant dense<0.000000e+00> : vector<128xf32>
    %30 = vector.multi_reduction <add>, %29, %cst_12 [0] : vector<4x128xf32> to vector<128xf32>
    %31 = vector.shape_cast %30 : vector<128xf32> to vector<1x128xf32>
    %cst_13 = arith.constant 2.500000e-01 : f32
    %32 = vector.broadcast %cst_13 : f32 to vector<1x128xf32>
    %33 = arith.mulf %28, %32 : vector<1x128xf32>
    %cst_14 = arith.constant 2.500000e-01 : f32
    %34 = vector.broadcast %cst_14 : f32 to vector<1x128xf32>
    %35 = arith.mulf %31, %34 : vector<1x128xf32>
    %36 = arith.mulf %33, %33 : vector<1x128xf32>
    %37 = arith.subf %35, %36 : vector<1x128xf32>
    %cst_15 = arith.constant 9.99999974E-6 : f32
    %38 = vector.broadcast %cst_15 : f32 to vector<1x128xf32>
    %39 = arith.addf %37, %38 : vector<1x128xf32>
    %40 = math.rsqrt %39 : vector<1x128xf32>
    %c0_16 = arith.constant 0 : index
    %c1_17 = arith.constant 1 : index
    %41 = vector.load %arg2[%c0_16, %c1_17] : memref<4x4xf32, #tpu.memory_space<vmem>>, vector<4x1xf32>
    %42 = vector.broadcast %33 : vector<1x128xf32> to vector<4x128xf32>
    %43 = arith.subf %26, %42 : vector<4x128xf32>
    %44 = vector.broadcast %40 : vector<1x128xf32> to vector<4x128xf32>
    %45 = vector.broadcast %41 : vector<4x1xf32> to vector<4x128xf32>
    %46 = arith.mulf %44, %45 : vector<4x128xf32>
    %47 = arith.mulf %43, %46 : vector<4x128xf32>
    %48 = arith.addf %24, %47 : vector<4x128xf32>
    %c2 = arith.constant 2 : index
    %c0_18 = arith.constant 0 : index
    %c0_19 = arith.constant 0 : index
    %49 = vector.load %arg1[%c2, %c0_18, %c0_19] : memref<4x4x128xf32, #tpu.memory_space<vmem>>, vector<1x4x128xf32>
    %50 = vector.shape_cast %49 : vector<1x4x128xf32> to vector<4x128xf32>
    %cst_20 = arith.constant dense<0.000000e+00> : vector<128xf32>
    %51 = vector.multi_reduction <add>, %50, %cst_20 [0] : vector<4x128xf32> to vector<128xf32>
    %52 = vector.shape_cast %51 : vector<128xf32> to vector<1x128xf32>
    %53 = arith.mulf %50, %50 : vector<4x128xf32>
    %cst_21 = arith.constant dense<0.000000e+00> : vector<128xf32>
    %54 = vector.multi_reduction <add>, %53, %cst_21 [0] : vector<4x128xf32> to vector<128xf32>
    %55 = vector.shape_cast %54 : vector<128xf32> to vector<1x128xf32>
    %cst_22 = arith.constant 2.500000e-01 : f32
    %56 = vector.broadcast %cst_22 : f32 to vector<1x128xf32>
    %57 = arith.mulf %52, %56 : vector<1x128xf32>
    %cst_23 = arith.constant 2.500000e-01 : f32
    %58 = vector.broadcast %cst_23 : f32 to vector<1x128xf32>
    %59 = arith.mulf %55, %58 : vector<1x128xf32>
    %60 = arith.mulf %57, %57 : vector<1x128xf32>
    %61 = arith.subf %59, %60 : vector<1x128xf32>
    %cst_24 = arith.constant 9.99999974E-6 : f32
    %62 = vector.broadcast %cst_24 : f32 to vector<1x128xf32>
    %63 = arith.addf %61, %62 : vector<1x128xf32>
    %64 = math.rsqrt %63 : vector<1x128xf32>
    %c0_25 = arith.constant 0 : index
    %c2_26 = arith.constant 2 : index
    %65 = vector.load %arg2[%c0_25, %c2_26] : memref<4x4xf32, #tpu.memory_space<vmem>>, vector<4x1xf32>
    %66 = vector.broadcast %57 : vector<1x128xf32> to vector<4x128xf32>
    %67 = arith.subf %50, %66 : vector<4x128xf32>
    %68 = vector.broadcast %64 : vector<1x128xf32> to vector<4x128xf32>
    %69 = vector.broadcast %65 : vector<4x1xf32> to vector<4x128xf32>
    %70 = arith.mulf %68, %69 : vector<4x128xf32>
    %71 = arith.mulf %67, %70 : vector<4x128xf32>
    %72 = arith.addf %48, %71 : vector<4x128xf32>
    %c3 = arith.constant 3 : index
    %c0_27 = arith.constant 0 : index
    %c0_28 = arith.constant 0 : index
    %73 = vector.load %arg1[%c3, %c0_27, %c0_28] : memref<4x4x128xf32, #tpu.memory_space<vmem>>, vector<1x4x128xf32>
    %74 = vector.shape_cast %73 : vector<1x4x128xf32> to vector<4x128xf32>
    %cst_29 = arith.constant dense<0.000000e+00> : vector<128xf32>
    %75 = vector.multi_reduction <add>, %74, %cst_29 [0] : vector<4x128xf32> to vector<128xf32>
    %76 = vector.shape_cast %75 : vector<128xf32> to vector<1x128xf32>
    %77 = arith.mulf %74, %74 : vector<4x128xf32>
    %cst_30 = arith.constant dense<0.000000e+00> : vector<128xf32>
    %78 = vector.multi_reduction <add>, %77, %cst_30 [0] : vector<4x128xf32> to vector<128xf32>
    %79 = vector.shape_cast %78 : vector<128xf32> to vector<1x128xf32>
    %cst_31 = arith.constant 2.500000e-01 : f32
    %80 = vector.broadcast %cst_31 : f32 to vector<1x128xf32>
    %81 = arith.mulf %76, %80 : vector<1x128xf32>
    %cst_32 = arith.constant 2.500000e-01 : f32
    %82 = vector.broadcast %cst_32 : f32 to vector<1x128xf32>
    %83 = arith.mulf %79, %82 : vector<1x128xf32>
    %84 = arith.mulf %81, %81 : vector<1x128xf32>
    %85 = arith.subf %83, %84 : vector<1x128xf32>
    %cst_33 = arith.constant 9.99999974E-6 : f32
    %86 = vector.broadcast %cst_33 : f32 to vector<1x128xf32>
    %87 = arith.addf %85, %86 : vector<1x128xf32>
    %88 = math.rsqrt %87 : vector<1x128xf32>
    %c0_34 = arith.constant 0 : index
    %c3_35 = arith.constant 3 : index
    %89 = vector.load %arg2[%c0_34, %c3_35] : memref<4x4xf32, #tpu.memory_space<vmem>>, vector<4x1xf32>
    %90 = vector.broadcast %81 : vector<1x128xf32> to vector<4x128xf32>
    %91 = arith.subf %74, %90 : vector<4x128xf32>
    %92 = vector.broadcast %88 : vector<1x128xf32> to vector<4x128xf32>
    %93 = vector.broadcast %89 : vector<4x1xf32> to vector<4x128xf32>
    %94 = arith.mulf %92, %93 : vector<4x128xf32>
    %95 = arith.mulf %91, %94 : vector<4x128xf32>
    %96 = arith.addf %72, %95 : vector<4x128xf32>
    %c0_36 = arith.constant 0 : index
    %c0_37 = arith.constant 0 : index
    %97 = vector.load %arg3[%c0_36, %c0_37] : memref<4x1xf32, #tpu.memory_space<vmem>>, vector<4x1xf32>
    %98 = vector.broadcast %97 : vector<4x1xf32> to vector<4x128xf32>
    %99 = arith.addf %96, %98 : vector<4x128xf32>
    %c0_38 = arith.constant 0 : index
    %c0_39 = arith.constant 0 : index
    %100 = vector.load %arg4[%c0_38, %c0_39] : memref<4x128xf32, #tpu.memory_space<vmem>>, vector<4x128xf32>
    tpu.vector_store %arg4[%c0_38, %c0_39], %99 {strides = array<i32>} : memref<4x128xf32, #tpu.memory_space<vmem>>, vector<4x128xf32>,
    return
  }
  func.func @transform_0(%arg0: i32) -> (i32, i32, i32) {
    %c0_i32 = arith.constant 0 : i32
    %c0_i32_0 = arith.constant 0 : i32
    %c0_i32_1 = arith.constant 0 : i32
    return %c0_i32, %c0_i32_0, %arg0 : i32, i32, i32
  }
  func.func @transform_1(%arg0: i32) -> (i32, i32) {
    %c0_i32 = arith.constant 0 : i32
    %c0_i32_0 = arith.constant 0 : i32
    %c0_i32_1 = arith.constant 0 : i32
    return %c0_i32, %c0_i32_0 : i32, i32
  }
  func.func @transform_2(%arg0: i32) -> (i32, i32) {
    %c0_i32 = arith.constant 0 : i32
    %c0_i32_0 = arith.constant 0 : i32
    %c0_i32_1 = arith.constant 0 : i32
    return %c0_i32, %c0_i32_0 : i32, i32
  }
  func.func @transform_3(%arg0: i32) -> (i32, i32) {
    %c0_i32 = arith.constant 0 : i32
    %c0_i32_0 = arith.constant 0 : i32
    return %c0_i32, %arg0 : i32, i32
  }
}

</mosaic_0001>

<llo_original>
// kernel: tpu_custom_call.1
$region0: #{tpu_custom_call.1}
  #allocation0 [shape = 'u32[]', space=smem, size = 0x4, offset = 0x4, fixed_abs, tag = 'smem constant byte address 0x4 - core index']
  #allocation1 [shape = 'u32[144,128]{1,0:T(1,128)}', space=vmem, size = 0x12000, scoped, tag = 'internal scratch']
  %s0 = inlined_call_operand.hbm [shape: f32[4,4,128], index: 0, kind: input, shape index: {}]
  %s1 = inlined_call_operand.vmem [shape: f32[4,4], index: 1, kind: input, shape index: {}]
  %s2 = inlined_call_operand.vmem [shape: f32[4,1], index: 2, kind: input, shape index: {}]
  %s3 = inlined_call_operand.hbm [shape: f32[4,128], index: 3, kind: output, shape index: {}]
  %s4 = sld [smem:[#allocation0]]
  $region26: #{tpu_custom_call.1} parent=0
    _
  %s6 = ssub.s32 1, %s4
  %s7 = scalar_select 0, %s6, %s4
  $region1: #{tpu_custom_call.1} parent=0
    #allocation2 [shape = 'u8[8192]{0}', space=vmem, size = 0x2000, scoped, tag = 'input window, operand 0, single buffered']
    #allocation3 [shape = 's32[1]{0}', space=sflag, size = 0x4, scoped, tag = 'scoped memory for tpu_custom_call.1']
    #allocation4 [shape = 's32[1]{0}', space=sflag, size = 0x4, scoped, tag = 'scoped memory for tpu_custom_call.1']
    #allocation5 [shape = 'u8[2048]{0}', space=vmem, size = 0x800, scoped, tag = 'output window, operand 0, single buffered']
    %8 = vsyncpa [#allocation3], 0
    %9 = vsyncpa [#allocation4], 0
    // Predicated region
    $region2: #{tpu_custom_call.1} parent=1 // pred_check
      _
    $region3: #{tpu_custom_call.1} parent=1 // pred_check_branch
      %11 = sbr.rel (0) target = $region5
    $region4: #{tpu_custom_call.1} parent=1 // pred_region
      %s13 = ssub.s32 256, 256
      %14 = vsyncadd [#allocation3], %s13
      %s15 = sshll.u32 [#allocation2], 4
      %s16 = int_to_ptr.vmem [resolvable:$true] %s15
      %21 = dma.hbm_to_vmem [thread:$0]  %s0, 256, %s16, [#allocation3], 64, 64, 4
    $region5: #{tpu_custom_call.1} parent=1 // pred_fallthru
      _
    // Predicated region
    $region6: #{tpu_custom_call.1} parent=1 // pred_check
      _
    $region7: #{tpu_custom_call.1} parent=1 // pred_check_branch
      %23 = sbr.rel (0) target = $region9
    $region8: #{tpu_custom_call.1} parent=1 // pred_region
      _
    $region9: #{tpu_custom_call.1} parent=1 // pred_fallthru
      _
    // Predicated region
    $region10: #{tpu_custom_call.1} parent=1 // pred_check
      _
    $region11: #{tpu_custom_call.1} parent=1 // pred_check_branch
      %25 = sbr.rel (0) target = $region13
    $region12: #{tpu_custom_call.1} parent=1 // pred_region
      _
    $region13: #{tpu_custom_call.1} parent=1 // pred_fallthru
      _
    // Predicated region
    $region14: #{tpu_custom_call.1} parent=1 // pred_check
      _
    $region15: #{tpu_custom_call.1} parent=1 // pred_check_branch
      %27 = sbr.rel (0) target = $region17
    $region16: #{tpu_custom_call.1} parent=1 // pred_region
      %28 = dma.done [#allocation3], 256
    $region17: #{tpu_custom_call.1} parent=1 // pred_fallthru
      _
    %v29 = vld [vmem:[#allocation2] sm:$0xf]
    %vm30 = vcmask 1043456
    %v31 = vsel %vm30, %v29, 0.0
    %v32 = vrot.slane %v31, 4
    %v33 = vadd.f32 %v31, %v32
    %v34 = vrot.slane %v33, 2
    %v35 = vadd.f32 %v33, %v34
    %v36 = vrot.slane %v35, 1
    %v37 = vadd.f32 %v35, %v36
    %v38 = vmul.f32 %v29, %v29
    %v39 = vsel %vm30, %v38, 0.0
    %v40 = vrot.slane %v39, 4
    %v41 = vadd.f32 %v39, %v40
    %v42 = vrot.slane %v41, 2
    %v43 = vadd.f32 %v41, %v42
    %v44 = vrot.slane %v43, 1
    %v45 = vadd.f32 %v43, %v44
    %v46 = vmul.f32 %v37, 0.25
    %v47 = vmul.f32 %v45, 0.25
    %v48 = vmul.f32 %v46, %v46
    %v49 = vsub.f32 %v47, %v48
    %v50 = vadd.f32 %v49, 1e-05
    %v51 = vrsqrt.pop %v50
    %v52 = vld [vmem:[%s1] sm:$0xf]
    %v53 = vsub.f32 %v29, %v46
    %55 = vset.pattern.permute.xlu0 0
    %56 = vperm.xlu0 %55, %v52
    %v57 = vpop.permute.xlu0 %56
    %v59 = vmul.f32 %v51, %v57
    %v60 = vmul.f32 %v53, %v59
    %v61 = vadd.f32 %v60, 0.0
    %s62 = scalar_lea.vmem [#allocation2], 4
    %v63 = vld [vmem:[%s62] sm:$0xf]
    %v64 = vsel %vm30, %v63, 0.0
    %v65 = vrot.slane %v64, 4
    %v66 = vadd.f32 %v64, %v65
    %v67 = vrot.slane %v66, 2
    %v68 = vadd.f32 %v66, %v67
    %v69 = vrot.slane %v68, 1
    %v70 = vadd.f32 %v68, %v69
    %v71 = vmul.f32 %v63, %v63
    %v72 = vsel %vm30, %v71, 0.0
    %v73 = vrot.slane %v72, 4
    %v74 = vadd.f32 %v72, %v73
    %v75 = vrot.slane %v74, 2
    %v76 = vadd.f32 %v74, %v75
    %v77 = vrot.slane %v76, 1
    %v78 = vadd.f32 %v76, %v77
    %v79 = vmul.f32 %v70, 0.25
    %v80 = vmul.f32 %v78, 0.25
    %v81 = vmul.f32 %v79, %v79
    %v82 = vsub.f32 %v80, %v81
    %v83 = vadd.f32 %v82, 1e-05
    %v84 = vrsqrt.pop %v83
    %v85 = vsub.f32 %v63, %v79
    %86 = vset.pattern.permute.xlu0 1
    %87 = vperm.xlu0 %86, %v52
    %v88 = vpop.permute.xlu0 %87
    %v90 = vmul.f32 %v84, %v88
    %v91 = vmul.f32 %v85, %v90
    %v92 = vadd.f32 %v61, %v91
    %s93 = scalar_lea.vmem [#allocation2], 8
    %v94 = vld [vmem:[%s93] sm:$0xf]
    %v95 = vsel %vm30, %v94, 0.0
    %v96 = vrot.slane %v95, 4
    %v97 = vadd.f32 %v95, %v96
    %v98 = vrot.slane %v97, 2
    %v99 = vadd.f32 %v97, %v98
    %v100 = vrot.slane %v99, 1
    %v101 = vadd.f32 %v99, %v100
    %v102 = vmul.f32 %v94, %v94
    %v103 = vsel %vm30, %v102, 0.0
    %v104 = vrot.slane %v103, 4
    %v105 = vadd.f32 %v103, %v104
    %v106 = vrot.slane %v105, 2
    %v107 = vadd.f32 %v105, %v106
    %v108 = vrot.slane %v107, 1
    %v109 = vadd.f32 %v107, %v108
    %v110 = vmul.f32 %v101, 0.25
    %v111 = vmul.f32 %v109, 0.25
    %v112 = vmul.f32 %v110, %v110
    %v113 = vsub.f32 %v111, %v112
    %v114 = vadd.f32 %v113, 1e-05
    %v115 = vrsqrt.pop %v114
    %v116 = vsub.f32 %v94, %v110
    %117 = vset.pattern.permute.xlu0 2
    %118 = vperm.xlu0 %117, %v52
    %v119 = vpop.permute.xlu0 %118
    %v121 = vmul.f32 %v115, %v119
    %v122 = vmul.f32 %v116, %v121
    %v123 = vadd.f32 %v92, %v122
    %s124 = scalar_lea.vmem [#allocation2], 12
    %v125 = vld [vmem:[%s124] sm:$0xf]
    %v126 = vsel %vm30, %v125, 0.0
    %v127 = vrot.slane %v126, 4
    %v128 = vadd.f32 %v126, %v127
    %v129 = vrot.slane %v128, 2
    %v130 = vadd.f32 %v128, %v129
    %v131 = vrot.slane %v130, 1
    %v132 = vadd.f32 %v130, %v131
    %v133 = vmul.f32 %v125, %v125
    %v134 = vsel %vm30, %v133, 0.0
    %v135 = vrot.slane %v134, 4
    %v136 = vadd.f32 %v134, %v135
    %v137 = vrot.slane %v136, 2
    %v138 = vadd.f32 %v136, %v137
    %v139 = vrot.slane %v138, 1
    %v140 = vadd.f32 %v138, %v139
    %v141 = vmul.f32 %v132, 0.25
    %v142 = vmul.f32 %v140, 0.25
    %v143 = vmul.f32 %v141, %v141
    %v144 = vsub.f32 %v142, %v143
    %v145 = vadd.f32 %v144, 1e-05
    %v146 = vrsqrt.pop %v145
    %v147 = vsub.f32 %v125, %v141
    %148 = vset.pattern.permute.xlu0 3
    %149 = vperm.xlu0 %148, %v52
    %v150 = vpop.permute.xlu0 %149
    %v152 = vmul.f32 %v146, %v150
    %v153 = vmul.f32 %v147, %v152
    %v154 = vadd.f32 %v123, %v153
    %v155 = vld [vmem:[%s2] sm:$0xf]
    %157 = vset.pattern.permute.xlu0 0
    %158 = vperm.xlu0 %157, %v155
    %v159 = vpop.permute.xlu0 %158
    %v161 = vadd.f32 %v154, %v159
    %162 = vst [vmem:[#allocation5] sm:$0xf] %v161
    // Predicated region
    $region18: #{tpu_custom_call.1} parent=1 // pred_check
      _
    $region19: #{tpu_custom_call.1} parent=1 // pred_check_branch
      %164 = sbr.rel (0) target = $region21
    $region20: #{tpu_custom_call.1} parent=1 // pred_region
      %s166 = ssub.s32 64, 64
      %167 = vsyncadd [#allocation4], %s166
      %s169 = sshll.u32 [#allocation5], 4
      %s170 = int_to_ptr.vmem [resolvable:$true] %s169
      %172 = dma.vmem_to_hbm [thread:$0]  %s170, 64, %s3, [#allocation4]
    $region21: #{tpu_custom_call.1} parent=1 // pred_fallthru
      _
    // Predicated region
    $region22: #{tpu_custom_call.1} parent=1 // pred_check
      _
    $region23: #{tpu_custom_call.1} parent=1 // pred_check_branch
      %174 = sbr.rel (0) target = $region25
    $region24: #{tpu_custom_call.1} parent=1 // pred_region
      %175 = dma.done [#allocation4], 64
    $region25: #{tpu_custom_call.1} parent=1 // pred_fallthru
      _
    %176 = vsyncpa [#allocation3], 1
    %177 = vsyncpa [#allocation4], 1

</llo_original>
